<compile_context>
chip_gen: v5e
topology: v5e:2x2
jax: 0.10.0
libtpu: 0.0.40
codegen_flags: <defaults>
</compile_context>

<pallas_src>
import jax
import jax.numpy as jnp
from jax.experimental import pallas as pl
from jax.experimental.pallas import tpu as pltpu


def _accumulate_scores(h_ref, enc_ref, acc_ref):
    """acc[s, b] += sum_h enc[s, b, h] * (sum_l h[l, b, h]) for this H tile."""
    # Sum the decoder state over layers in f32, then multiply in the native
    # dtype (bf16 stays bf16 on the VPU of v6e/v7x) and accumulate the lane
    # reduce in f32 -> no full-tile f32 copy of the enc block is materialized.
    h_sum = jnp.sum(h_ref[...].astype(jnp.float32), axis=0)          # [tb, th]
    h_sum = h_sum.astype(enc_ref.dtype)
    prod = enc_ref[...] * h_sum[None, :, :]                          # [S, tb, th]
    acc_ref[...] += jnp.sum(prod, axis=-1, dtype=jnp.float32)        # [S, tb]


def _softmax_over_seq(scores, out_ref):
    # Numerically stable softmax along the sequence (sublane) axis.
    # Exact normalization (plain divide): attention rows must sum to 1.
    m = jnp.max(scores, axis=0, keepdims=True)                       # [1, tb]
    e = jnp.exp(scores - m)                                          # [S, tb]
    denom = jnp.sum(e, axis=0, keepdims=True)                        # [1, tb]
    out_ref[...] = (e / denom).astype(out_ref.dtype)


def _luong_kernel_masked(h_ref, enc_ref, mask_ref, out_ref, acc_ref):
    k = pl.program_id(1)

    @pl.when(k == 0)
    def _():
        acc_ref[...] = jnp.zeros_like(acc_ref)

    _accumulate_scores(h_ref, enc_ref, acc_ref)

    @pl.when(k == pl.num_programs(1) - 1)
    def _():
        scores = jnp.where(mask_ref[...] == 0, jnp.float32(-1e18), acc_ref[...])
        _softmax_over_seq(scores, out_ref)


def _luong_kernel_nomask(h_ref, enc_ref, out_ref, acc_ref):
    k = pl.program_id(1)

    @pl.when(k == 0)
    def _():
        acc_ref[...] = jnp.zeros_like(acc_ref)

    _accumulate_scores(h_ref, enc_ref, acc_ref)

    @pl.when(k == pl.num_programs(1) - 1)
    def _():
        _softmax_over_seq(acc_ref[...], out_ref)


def _vmem_capacity_bytes(default_bytes=64 * 1024 * 1024):
    # Generation-aware sizing: v7x has 64 MiB VMEM per TensorCore, v5e/v6e 128.
    try:
        return int(pltpu.get_tpu_info().vmem_capacity_bytes)
    except Exception:
        return default_bytes  # conservative (v7x) fallback


def _choose_tiles(B, S, H, itemsize, budget_bytes):
    """Pick (tb, th) = (batch tile, hidden tile).

    (8,128)-rule constraints on the last two block dims:
      * tb is the lane dim of the mask/out blocks -> multiple of 128, or == B.
      * th is the lane dim of the enc/h blocks    -> multiple of 128, or == H.
    Tiles always divide their axis exactly so no ragged block feeds the
    H reduction.
    """
    if B > 128 and B % 128 == 0:
        tb = 128  # >= 2 grid steps along "parallel" batch -> pipelining + v7x megacore
    else:
        tb = B
    th = H
    if S * tb * th * itemsize > budget_bytes and H > 128 and H % 128 == 0:
        th = 128  # smallest aligned tile; enlarge to the biggest divisor that fits
        for cand in range(H - 128, 128, -128):
            if H % cand == 0 and S * tb * cand * itemsize <= budget_bytes:
                th = cand
                break
    return tb, th


def luong_attention(h_state, enc_outputs, mask=None):
    """
    h_state:     [n_layers, batch, hidden]
    enc_outputs: [seq_len,  batch, hidden]
    mask:        [seq_len,  batch, 1] bool/int (optional)
    returns:     [seq_len,  batch, 1] float32 attention weights
    """
    if h_state.shape[-1] != enc_outputs.shape[-1]:
        raise ValueError("Hidden size does not match.")
    L, Bh, H = h_state.shape
    S, B, _ = enc_outputs.shape
    if Bh != B:
        raise ValueError("Batch size does not match.")

    itemsize = jnp.dtype(enc_outputs.dtype).itemsize
    vmem_cap = _vmem_capacity_bytes()
    enc_budget = vmem_cap // 16  # ~4 MiB enc tile on v7x, ~8 MiB on v5e/v6e
    tb, th = _choose_tiles(B, S, H, itemsize, enc_budget)
    grid = (pl.cdiv(B, tb), pl.cdiv(H, th))

    # Per-step VMEM estimate: double-buffered inputs/outputs + f32 accumulator.
    enc_tile = S * tb * th * itemsize
    h_tile = L * tb * th * itemsize
    io_tiles = S * tb * 4 * (2 if mask is not None else 1)  # mask(int32) + out
    per_step = 2 * (enc_tile + h_tile + io_tiles) + S * tb * 4
    vmem_limit = int(min(0.85 * vmem_cap, max(32 * 1024 * 1024, 2 * per_step)))

    # Native-layout BlockSpecs: no wrapper transpose, enc is read once from HBM.
    h_spec = pl.BlockSpec((L, tb, th), lambda i, k: (0, i, k))
    enc_spec = pl.BlockSpec((S, tb, th), lambda i, k: (0, i, k))
    out_spec = pl.BlockSpec((S, tb), lambda i, k: (0, i))
    # Note: on v5e/v6e (128 MiB VMEM) enc_spec could additionally use
    # pipeline_mode=pl.Buffered(3) for a slightly deeper DMA pipeline.

    compiler_params = pltpu.CompilerParams(
        # Batch tiles are independent ("parallel" -> megacore on v7x); the
        # hidden axis reduces into the VMEM accumulator, so it stays
        # "arbitrary" and last in the grid.
        dimension_semantics=("parallel", "arbitrary"),
        vmem_limit_bytes=vmem_limit,
    )

    if mask is not None:
        mask_sb = mask.reshape(S, B).astype(jnp.int32)  # [S, B]; free squeeze
        out_sb = pl.pallas_call(
            _luong_kernel_masked,
            out_shape=jax.ShapeDtypeStruct((S, B), jnp.float32),
            grid_spec=pltpu.PrefetchScalarGridSpec(
                num_scalar_prefetch=0,
                grid=grid,
                in_specs=[h_spec, enc_spec,
                          pl.BlockSpec((S, tb), lambda i, k: (0, i))],
                out_specs=out_spec,
                scratch_shapes=[pltpu.VMEM((S, tb), jnp.float32)],
            ),
            compiler_params=compiler_params,
        )(h_state, enc_outputs, mask_sb)
    else:
        out_sb = pl.pallas_call(
            _luong_kernel_nomask,
            out_shape=jax.ShapeDtypeStruct((S, B), jnp.float32),
            grid_spec=pltpu.PrefetchScalarGridSpec(
                num_scalar_prefetch=0,
                grid=grid,
                in_specs=[h_spec, enc_spec],
                out_specs=out_spec,
                scratch_shapes=[pltpu.VMEM((S, tb), jnp.float32)],
            ),
            compiler_params=compiler_params,
        )(h_state, enc_outputs)

    # [S, B] -> [S, B, 1]: metadata-only reshape, no data movement.
    return out_sb[..., None]


def _reference(h_state, enc_outputs, mask=None):
    # Pure-JAX reference mirroring the PyTorch forward exactly.
    if h_state.shape[0] > 1:
        h_state = jnp.sum(h_state, axis=0, keepdims=True)
    scores = jnp.sum(enc_outputs * h_state, axis=2)[..., None]       # [S, B, 1]
    if mask is not None:
        scores = jnp.where(mask == 0, -1e18, scores)
    return jax.nn.softmax(scores.astype(jnp.float32), axis=0)


if __name__ == "__main__":
    key = jax.random.PRNGKey(0)
    n_layers, seq_len, batch, hidden = 2, 8, 2, 32

    k1, k2 = jax.random.split(key, 2)
    h_state = jax.random.normal(k1, (n_layers, batch, hidden), dtype=jnp.float32)
    enc_outputs = jax.random.normal(k2, (seq_len, batch, hidden), dtype=jnp.float32)
    # Boolean pad mask [seq_len, batch, 1]; keep the first positions, pad the tail.
    lengths = jnp.array([6, 4], dtype=jnp.int32)
    pos = jnp.arange(seq_len)[:, None]                                # [S, 1]
    mask = (pos < lengths[None, :])[..., None]                        # [S, B, 1] bool

    attn = jax.block_until_ready(luong_attention(h_state, enc_outputs, mask))
    ref = _reference(h_state, enc_outputs, mask)

    assert attn.shape == (seq_len, batch, 1)
    assert jnp.allclose(attn, ref, atol=1e-4, rtol=1e-4), "mismatch vs reference"
    # Attention over the sequence axis sums to 1 (exact softmax divide).
    assert jnp.allclose(jnp.sum(attn, axis=0), 1.0, atol=1e-5)
    # Masked (pad) positions get (numerically) zero attention.
    assert jnp.all(jnp.where(mask, 0.0, attn) < 1e-6)

    # Also exercise the specialized mask=None kernel.
    attn_nomask = jax.block_until_ready(luong_attention(h_state, enc_outputs, None))
    ref_nomask = _reference(h_state, enc_outputs, None)
    assert jnp.allclose(attn_nomask, ref_nomask, atol=1e-4, rtol=1e-4)

    print("KERNEL_OK")
</pallas_src>

<mosaic_0001>
module attributes {stable_mosaic.version = 11 : i64} {
  func.func @_luong_kernel_masked(%arg0: i32, %arg1: i32, %arg2: memref<2x2x32xf32, #tpu.memory_space<vmem>>, %arg3: memref<8x2x32xf32, #tpu.memory_space<vmem>>, %arg4: memref<8x2xi32, #tpu.memory_space<vmem>>, %arg5: memref<8x2xf32, #tpu.memory_space<vmem>>, %arg6: memref<8x2xf32, #tpu.memory_space<vmem>>) attributes {dimension_semantics = [#tpu.dimension_semantics<parallel>, #tpu.dimension_semantics<arbitrary>], iteration_bounds = array<i64: 1, 1>, scalar_prefetch = 0 : i64, scratch_operands = 1 : i64, tpu.core_type = #tpu.core_type<tc>, window_params = [{transform_indices = @transform_0, window_bounds = array<i64: 2, 2, 32>}, {transform_indices = @transform_1, window_bounds = array<i64: 8, 2, 32>}, {transform_indices = @transform_2, window_bounds = array<i64: 8, 2>}, {transform_indices = @transform_3, window_bounds = array<i64: 8, 2>}]} {
    %c0_i32 = arith.constant 0 : i32
    %0 = arith.cmpi eq, %arg1, %c0_i32 : i32
    %1 = arith.extui %0 : i1 to i32
    %c0_i32_0 = arith.constant 0 : i32
    %2 = arith.cmpi ne, %1, %c0_i32_0 : i32
    scf.if %2 {
      %cst_13 = arith.constant 0.000000e+00 : f32
      %16 = vector.broadcast %cst_13 : f32 to vector<8x2xf32>
      %c0_14 = arith.constant 0 : index
      %c0_15 = arith.constant 0 : index
      %17 = vector.load %arg6[%c0_14, %c0_15] : memref<8x2xf32, #tpu.memory_space<vmem>>, vector<8x2xf32>
      tpu.vector_store %arg6[%c0_14, %c0_15], %16 {strides = array<i32>} : memref<8x2xf32, #tpu.memory_space<vmem>>, vector<8x2xf32>,
    } else {
    }
    %c0 = arith.constant 0 : index
    %c0_1 = arith.constant 0 : index
    %c0_2 = arith.constant 0 : index
    %3 = vector.load %arg2[%c0, %c0_1, %c0_2] : memref<2x2x32xf32, #tpu.memory_space<vmem>>, vector<2x2x32xf32>
    %cst = arith.constant dense<0.000000e+00> : vector<2x32xf32>
    %4 = vector.multi_reduction <add>, %3, %cst [0] : vector<2x2x32xf32> to vector<2x32xf32>
    %c0_3 = arith.constant 0 : index
    %c0_4 = arith.constant 0 : index
    %c0_5 = arith.constant 0 : index
    %5 = vector.load %arg3[%c0_3, %c0_4, %c0_5] : memref<8x2x32xf32, #tpu.memory_space<vmem>>, vector<8x2x32xf32>
    %6 = vector.shape_cast %4 : vector<2x32xf32> to vector<1x2x32xf32>
    %7 = vector.broadcast %6 : vector<1x2x32xf32> to vector<8x2x32xf32>
    %8 = arith.mulf %5, %7 : vector<8x2x32xf32>
    %c0_6 = arith.constant 0 : index
    %c0_7 = arith.constant 0 : index
    %9 = vector.load %arg6[%c0_6, %c0_7] : memref<8x2xf32, #tpu.memory_space<vmem>>, vector<8x2xf32>
    %cst_8 = arith.constant dense<0.000000e+00> : vector<8x2xf32>
    %10 = vector.multi_reduction <add>, %8, %cst_8 [2] : vector<8x2x32xf32> to vector<8x2xf32>
    %11 = arith.addf %9, %10 : vector<8x2xf32>
    %c0_9 = arith.constant 0 : index
    %c0_10 = arith.constant 0 : index
    %12 = vector.load %arg6[%c0_9, %c0_10] : memref<8x2xf32, #tpu.memory_space<vmem>>, vector<8x2xf32>
    tpu.vector_store %arg6[%c0_9, %c0_10], %11 {strides = array<i32>} : memref<8x2xf32, #tpu.memory_space<vmem>>, vector<8x2xf32>,
    %c0_i32_11 = arith.constant 0 : i32
    %13 = arith.cmpi eq, %arg1, %c0_i32_11 : i32
    %14 = arith.extui %13 : i1 to i32
    %c0_i32_12 = arith.constant 0 : i32
    %15 = arith.cmpi ne, %14, %c0_i32_12 : i32
    scf.if %15 {
      %c0_13 = arith.constant 0 : index
      %c0_14 = arith.constant 0 : index
      %16 = vector.load %arg4[%c0_13, %c0_14] : memref<8x2xi32, #tpu.memory_space<vmem>>, vector<8x2xi32>
      %c0_i32_15 = arith.constant 0 : i32
      %17 = vector.broadcast %c0_i32_15 : i32 to vector<8x2xi32>
      %18 = arith.cmpi eq, %16, %17 : vector<8x2xi32>
      %c0_16 = arith.constant 0 : index
      %c0_17 = arith.constant 0 : index
      %19 = vector.load %arg6[%c0_16, %c0_17] : memref<8x2xf32, #tpu.memory_space<vmem>>, vector<8x2xf32>
      %cst_18 = arith.constant -9.99999984E+17 : f32
      %20 = vector.broadcast %cst_18 : f32 to vector<8x2xf32>
      %21 = arith.select %18, %20, %19 : vector<8x2xi1>, vector<8x2xf32>
      %cst_19 = arith.constant dense<0xFF800000> : vector<2xf32>
      %22 = vector.multi_reduction <maximumf>, %21, %cst_19 [0] : vector<8x2xf32> to vector<2xf32>
      %23 = vector.shape_cast %22 : vector<2xf32> to vector<1x2xf32>
      %24 = vector.broadcast %23 : vector<1x2xf32> to vector<8x2xf32>
      %25 = arith.subf %21, %24 : vector<8x2xf32>
      %26 = math.exp %25 : vector<8x2xf32>
      %cst_20 = arith.constant dense<0.000000e+00> : vector<2xf32>
      %27 = vector.multi_reduction <add>, %26, %cst_20 [0] : vector<8x2xf32> to vector<2xf32>
      %28 = vector.shape_cast %27 : vector<2xf32> to vector<1x2xf32>
      %29 = vector.broadcast %28 : vector<1x2xf32> to vector<8x2xf32>
      %30 = arith.divf %26, %29 : vector<8x2xf32>
      %c0_21 = arith.constant 0 : index
      %c0_22 = arith.constant 0 : index
      %31 = vector.load %arg5[%c0_21, %c0_22] : memref<8x2xf32, #tpu.memory_space<vmem>>, vector<8x2xf32>
      tpu.vector_store %arg5[%c0_21, %c0_22], %30 {strides = array<i32>} : memref<8x2xf32, #tpu.memory_space<vmem>>, vector<8x2xf32>,
    } else {
    }
    return
  }
  func.func @transform_0(%arg0: i32, %arg1: i32) -> (i32, i32, i32) {
    %c0_i32 = arith.constant 0 : i32
    %c0_i32_0 = arith.constant 0 : i32
    return %c0_i32, %arg0, %arg1 : i32, i32, i32
  }
  func.func @transform_1(%arg0: i32, %arg1: i32) -> (i32, i32, i32) {
    %c0_i32 = arith.constant 0 : i32
    %c0_i32_0 = arith.constant 0 : i32
    return %c0_i32, %arg0, %arg1 : i32, i32, i32
  }
  func.func @transform_2(%arg0: i32, %arg1: i32) -> (i32, i32) {
    %c0_i32 = arith.constant 0 : i32
    %c0_i32_0 = arith.constant 0 : i32
    return %c0_i32, %arg0 : i32, i32
  }
  func.func @transform_3(%arg0: i32, %arg1: i32) -> (i32, i32) {
    %c0_i32 = arith.constant 0 : i32
    %c0_i32_0 = arith.constant 0 : i32
    return %c0_i32, %arg0 : i32, i32
  }
}

</mosaic_0001>

<llo_original>
// kernel: tpu_custom_call.1
$region0: #{tpu_custom_call.1}
  #allocation0 [shape = 'u32[]', space=smem, size = 0x4, offset = 0x4, fixed_abs, tag = 'smem constant byte address 0x4 - core index']
  #allocation1 [shape = 'u32[72,128]{1,0:T(1,128)}', space=vmem, size = 0x9000, scoped, tag = 'internal scratch']
  #allocation2 [shape = 'f32[8,2]{1,0:T(8,128)}', space=vmem, size = 0x1000, scoped, tag = 'scratch operand']
  %s0 = inlined_call_operand.vmem [shape: f32[2,2,32], index: 0, kind: input, shape index: {}]
  %s1 = inlined_call_operand.hbm [shape: f32[8,2,32], index: 1, kind: input, shape index: {}]
  %s2 = inlined_call_operand.vmem [shape: s32[8,2], index: 2, kind: input, shape index: {}]
  %s3 = inlined_call_operand.vmem [shape: f32[8,2], index: 3, kind: output, shape index: {}]
  %s4 = sld [smem:[#allocation0]]
  $region34: #{tpu_custom_call.1} parent=0
    _
  %s6 = ssub.s32 1, %s4
  %s7 = scalar_select 0, %s6, %s4
  $region1: #{tpu_custom_call.1} parent=0
    #allocation3 [shape = 'u8[8192]{0}', space=vmem, size = 0x2000, scoped, tag = 'input window, operand 1, single buffered']
    #allocation4 [shape = 's32[1]{0}', space=sflag, size = 0x4, scoped, tag = 'scoped memory for tpu_custom_call.1']
    %8 = vsyncpa [#allocation4], 0
    // Predicated region
    $region2: #{tpu_custom_call.1} parent=1 // pred_check
      _
    $region3: #{tpu_custom_call.1} parent=1 // pred_check_branch
      %10 = sbr.rel (0) target = $region5
    $region4: #{tpu_custom_call.1} parent=1 // pred_region
      _
    $region5: #{tpu_custom_call.1} parent=1 // pred_fallthru
      _
    // Predicated region
    $region6: #{tpu_custom_call.1} parent=1 // pred_check
      _
    $region7: #{tpu_custom_call.1} parent=1 // pred_check_branch
      %12 = sbr.rel (0) target = $region9
    $region8: #{tpu_custom_call.1} parent=1 // pred_region
      %14 = vsyncadd [#allocation4], 0
      %s15 = sshll.u32 %s1, 4
      %s16 = int_to_ptr.hbm [resolvable:$true] %s15
      %s17 = sshll.u32 [#allocation3], 4
      %s18 = int_to_ptr.vmem [resolvable:$true] %s17
      %23 = dma.hbm_to_vmem [thread:$0]  %s16, 256, %s18, [#allocation4], 32, 32, 2
    $region9: #{tpu_custom_call.1} parent=1 // pred_fallthru
      _
    // Predicated region
    $region10: #{tpu_custom_call.1} parent=1 // pred_check
      _
    $region11: #{tpu_custom_call.1} parent=1 // pred_check_branch
      %25 = sbr.rel (0) target = $region13
    $region12: #{tpu_custom_call.1} parent=1 // pred_region
      _
    $region13: #{tpu_custom_call.1} parent=1 // pred_fallthru
      _
    // Predicated region
    $region14: #{tpu_custom_call.1} parent=1 // pred_check
      _
    $region15: #{tpu_custom_call.1} parent=1 // pred_check_branch
      %27 = sbr.rel (0) target = $region17
    $region16: #{tpu_custom_call.1} parent=1 // pred_region
      %29 = dma.done [#allocation4], 256
    $region17: #{tpu_custom_call.1} parent=1 // pred_fallthru
      _
    %p30 = scmp.eq.s32.totalorder 0, 0
    // Predicated region
    $region18: #{tpu_custom_call.1} parent=1 // pred_check
      %p31 = pneg %p30
    $region19: #{tpu_custom_call.1} parent=1 // pred_check_branch
      %33 = sbr.rel (%p31) target = $region21
    $region20: #{tpu_custom_call.1} parent=1 // pred_region
      %vm34 = vcmask 15360
      %35 = vst.msk [vmem:[#allocation2] sm:$0xff] %vm34, 0.0
    $region21: #{tpu_custom_call.1} parent=1 // pred_fallthru
      _
    %v36 = vld [vmem:[%s0] sm:$0x3]
    %v37 = vld [vmem:[%s0 + $0x2] sm:$0x3]
    %vm38 = vcmask 254976
    %v39 = vsel %vm38, %v36, 0.0
    %v40 = vsel %vm38, %v37, 0.0
    %v41 = vadd.f32 %v39, %v40
    %v42 = vld [vmem:[#allocation3] sm:$0x3]
    %v43 = vld [vmem:[#allocation3 + $0x2] sm:$0x3]
    %v44 = vld [vmem:[#allocation3 + $0x4] sm:$0x3]
    %v45 = vld [vmem:[#allocation3 + $0x6] sm:$0x3]
    %v46 = vld [vmem:[#allocation3 + $0x8] sm:$0x3]
    %v47 = vld [vmem:[#allocation3 + $0xa] sm:$0x3]
    %v48 = vld [vmem:[#allocation3 + $0xc] sm:$0x3]
    %v49 = vld [vmem:[#allocation3 + $0xe] sm:$0x3]
    %v50 = vmul.f32 %v42, %v41
    %v51 = vmul.f32 %v43, %v41
    %v52 = vmul.f32 %v44, %v41
    %v53 = vmul.f32 %v45, %v41
    %v54 = vmul.f32 %v46, %v41
    %v55 = vmul.f32 %v47, %v41
    %v56 = vmul.f32 %v48, %v41
    %v57 = vmul.f32 %v49, %v41
    %v58 = vld [vmem:[#allocation2] sm:$0xff]
    %v59 = vsel %vm38, %v50, 0.0
    %60 = vadd.xlane.f32.xlu0 %v59
    %v61 = vpop.xlane.xlu0 %60
    %v62 = vsel %vm38, %v51, 0.0
    %63 = vadd.xlane.f32.xlu0 %v62
    %v64 = vpop.xlane.xlu0 %63
    %v65 = vsel %vm38, %v52, 0.0
    %66 = vadd.xlane.f32.xlu0 %v65
    %v67 = vpop.xlane.xlu0 %66
    %v68 = vsel %vm38, %v53, 0.0
    %69 = vadd.xlane.f32.xlu0 %v68
    %v70 = vpop.xlane.xlu0 %69
    %v71 = vsel %vm38, %v54, 0.0
    %72 = vadd.xlane.f32.xlu0 %v71
    %v73 = vpop.xlane.xlu0 %72
    %v74 = vsel %vm38, %v55, 0.0
    %75 = vadd.xlane.f32.xlu0 %v74
    %v76 = vpop.xlane.xlu0 %75
    %v77 = vsel %vm38, %v56, 0.0
    %78 = vadd.xlane.f32.xlu0 %v77
    %v79 = vpop.xlane.xlu0 %78
    %v80 = vsel %vm38, %v57, 0.0
    %81 = vadd.xlane.f32.xlu0 %v80
    %v82 = vpop.xlane.xlu0 %81
    %v91 = vlaneseq
    %v92 = vand.u32 %v91, 127
    %v93 = vperm.slane %v61, %v92
    %v94 = vperm.slane %v64, %v92
    %v95 = vperm.slane %v67, %v92
    %v96 = vperm.slane %v70, %v92
    %v97 = vperm.slane %v73, %v92
    %v98 = vperm.slane %v76, %v92
    %v99 = vperm.slane %v79, %v92
    %v100 = vperm.slane %v82, %v92
    %vm101 = vcmask 1041409
    %v102 = vsel %vm101, %v94, %v93
    %vm103 = vcmask 1042434
    %v104 = vsel %vm103, %v95, %v102
    %vm105 = vcmask 1043459
    %v106 = vsel %vm105, %v96, %v104
    %vm107 = vcmask 1044484
    %v108 = vsel %vm107, %v97, %v106
    %vm109 = vcmask 1045509
    %v110 = vsel %vm109, %v98, %v108
    %vm111 = vcmask 1046534
    %v112 = vsel %vm111, %v99, %v110
    %vm113 = vcmask 1047559
    %v114 = vsel %vm113, %v100, %v112
    %v116 = vadd.f32 %v58, %v114
    %vm117 = vcmask 15360
    %118 = vst.msk [vmem:[#allocation2] sm:$0xff] %vm117, %v116
    // Predicated region
    $region22: #{tpu_custom_call.1} parent=1 // pred_check
      %p119 = pneg %p30
    $region23: #{tpu_custom_call.1} parent=1 // pred_check_branch
      %121 = sbr.rel (%p119) target = $region25
    $region24: #{tpu_custom_call.1} parent=1 // pred_region
      %v122 = vld [vmem:[%s2] sm:$0xff]
      %vm123 = vcmp.eq.s32.totalorder %v122, 0
      %v124 = vld [vmem:[#allocation2] sm:$0xff]
      %v125 = vsel %vm123, -1e+18, %v124
      %v126 = vsel %vm117, %v125, -inf
      %v127 = vrot.slane %v126, 4
      %v128 = vmax.f32 %v126, %v127
      %v129 = vrot.slane %v128, 2
      %v130 = vmax.f32 %v128, %v129
      %v131 = vrot.slane %v130, 1
      %v132 = vmax.f32 %v130, %v131
      %v133 = vsub.f32 %v125, %v132
      %v134 = vmul.f32 %v133, 1.442695
      %v135 = vpow.pop %v134
      %v136 = vsel %vm117, %v135, 0.0
      %v137 = vrot.slane %v136, 4
      %v138 = vadd.f32 %v136, %v137
      %v139 = vrot.slane %v138, 2
      %v140 = vadd.f32 %v138, %v139
      %v141 = vrot.slane %v140, 1
      %v142 = vadd.f32 %v140, %v141
      %v143 = vrcp.pop %v142
      %v144 = vmul.f32 %v142, %v143
      %v145 = vsub.f32 1.0, %v144
      %v146 = vmul.f32 %v143, %v145
      %v147 = vadd.f32 %v143, %v146
      %vm148 = vweird.f32 %v142
      %vm149 = vweird.f32 %v143
      %vm150 = vmor %vm148, %vm149
      %v151 = vsel %vm150, %v143, %v147
      %v152 = vand.u32 2147483647, %v142
      %vm153 = vcmp.eq.f32.partialorder %v152, 8.507059e+37
      %v154 = vand.u32 %v142, 2147483648
      %v155 = vor.u32 1.1754944e-38, %v154
      %v156 = vsel %vm153, %v155, %v151
      %v157 = vmul.f32 %v135, %v156
      %158 = vst.msk [vmem:[%s3] sm:$0xff] %vm117, %v157
    $region25: #{tpu_custom_call.1} parent=1 // pred_fallthru
      _
    // Predicated region
    $region26: #{tpu_custom_call.1} parent=1 // pred_check
      _
    $region27: #{tpu_custom_call.1} parent=1 // pred_check_branch
      %160 = sbr.rel (0) target = $region29
    $region28: #{tpu_custom_call.1} parent=1 // pred_region
      _
    $region29: #{tpu_custom_call.1} parent=1 // pred_fallthru
      _
    // Predicated region
    $region30: #{tpu_custom_call.1} parent=1 // pred_check
      _
    $region31: #{tpu_custom_call.1} parent=1 // pred_check_branch
      %162 = sbr.rel (0) target = $region33
    $region32: #{tpu_custom_call.1} parent=1 // pred_region
      _
    $region33: #{tpu_custom_call.1} parent=1 // pred_fallthru
      _
    %163 = vsyncpa [#allocation4], 1

</llo_original>
